<compile_context>
chip_gen: v6e
topology: v6e:2x2x1
jax: 0.10.0
libtpu: 0.0.40
codegen_flags: <defaults>
</compile_context>

<pallas_src>
import functools

import jax
import jax.numpy as jnp
from jax.experimental import pallas as pl
from jax.experimental.pallas import tpu as pltpu


def _build_pe(max_len: int, d_model: int) -> jnp.ndarray:
    """Deterministic sinusoidal positional-encoding buffer (matches PyTorch init)."""
    position = jnp.arange(0, max_len, dtype=jnp.float32)[:, None]            # (max_len, 1)
    div_term = jnp.exp(jnp.arange(0, d_model, 2, dtype=jnp.float32)
                       * (-jnp.log(10000.0) / d_model))                      # (d_model/2,)
    pe = jnp.zeros((max_len, d_model), dtype=jnp.float32)
    pe = pe.at[:, 0::2].set(jnp.sin(position * div_term))
    pe = pe.at[:, 1::2].set(jnp.cos(position * div_term))
    return pe[:, None, :]                                                    # (max_len, 1, D)


# ----------------------------- kernels ------------------------------------- #

def _pe_add_kernel(x_ref, pe_ref, o_ref):
    # x_ref : (TS, B, D)   pe_ref: (TS, 1, D)  -> broadcast add over batch.
    x = x_ref[...].astype(jnp.float32)
    pe = pe_ref[...].astype(jnp.float32)
    o_ref[...] = (x + pe).astype(o_ref.dtype)


def _pe_add_dropout_kernel(x_ref, pe_ref, u_ref, o_ref, *, p: float):
    # Inverted dropout: keep with prob (1 - p), scale kept values by 1/(1 - p).
    x = x_ref[...].astype(jnp.float32)
    pe = pe_ref[...].astype(jnp.float32)
    y = x + pe
    keep = u_ref[...] >= jnp.float32(p)
    scale = jnp.float32(1.0 / (1.0 - p))
    o_ref[...] = jnp.where(keep, y * scale, jnp.zeros_like(y)).astype(o_ref.dtype)


# ----------------------------- wrapper -------------------------------------- #

def _choose_seq_tile(S: int, B: int, D: int, itemsize: int,
                     target_bytes: int = 1 << 20) -> int:
    """Pick TS so one (TS, B, D) tile is ~1 MiB of padded VMEM (mem-bound plateau),
    while still giving >= 2 grid steps (v7x has 2 TensorCores)."""
    sub = 8 * max(1, 4 // itemsize)                 # sublane tile: 8 f32 / 16 bf16
    pad_b = -(-B // sub) * sub
    pad_d = -(-D // 128) * 128
    padded_row = pad_b * pad_d * itemsize           # padded VMEM bytes per seq row
    ts = max(1, min(S, target_bytes // padded_row))
    if S >= 2:
        ts = min(ts, -(-S // 2))                    # at least two grid steps
    return int(ts)


def positional_encoding_forward(x, pe, *, p_dropout: float,
                                training: bool = False, rng_key=None):
    """x: (S, B, D); pe: (max_len, 1, D) with max_len >= S."""
    S, B, D = x.shape
    assert pe.ndim == 3 and pe.shape[1] == 1 and pe.shape[2] == D and pe.shape[0] >= S

    pe_s = pe[:S]                                    # (S, 1, D), stays f32

    itemsize = jnp.dtype(x.dtype).itemsize
    ts = _choose_seq_tile(S, B, D, itemsize)
    grid = (pl.cdiv(S, ts),)

    x_spec = pl.BlockSpec((ts, B, D), lambda s: (s, 0, 0))
    pe_spec = pl.BlockSpec((ts, 1, D), lambda s: (s, 0, 0))
    out_spec = pl.BlockSpec((ts, B, D), lambda s: (s, 0, 0))
    out_shape = jax.ShapeDtypeStruct((S, B, D), x.dtype)
    cparams = pltpu.CompilerParams(dimension_semantics=("parallel",))

    p = float(p_dropout)

    if (not training) or p == 0.0:
        return pl.pallas_call(
            _pe_add_kernel,
            out_shape=out_shape,
            grid=grid,
            in_specs=[x_spec, pe_spec],
            out_specs=out_spec,
            compiler_params=cparams,
        )(x, pe_s)

    if p >= 1.0:                                     # torch Dropout(p=1): all zeros
        return jnp.zeros_like(x)

    if rng_key is None:
        rng_key = jax.random.PRNGKey(0)
    # Uniform randoms drawn outside the kernel (interpret-safe, tiling-invariant).
    u = jax.random.uniform(rng_key, (S, B, D), dtype=jnp.float32)

    kernel = functools.partial(_pe_add_dropout_kernel, p=p)
    return pl.pallas_call(
        kernel,
        out_shape=out_shape,
        grid=grid,
        in_specs=[x_spec, pe_spec, x_spec],          # u uses the same (TS, B, D) block
        out_specs=out_spec,
        compiler_params=cparams,
    )(x, pe_s, u)


# ------------------------------- demo --------------------------------------- #

if __name__ == "__main__":
    # Small shapes consistent with the module's (seq, batch, d_model) convention.
    S, B, D = 8, 2, 32
    MAX_LEN = 64
    P_DROPOUT = 0.1

    key = jax.random.PRNGKey(0)
    kx, kdrop = jax.random.split(key)
    x = jax.random.normal(kx, (S, B, D), dtype=jnp.float32)
    pe = _build_pe(MAX_LEN, D)

    # Eval-mode forward (dropout is identity) — matches PyTorch module.eval().
    out_eval = positional_encoding_forward(x, pe, p_dropout=P_DROPOUT, training=False)
    out_eval = jax.block_until_ready(out_eval)
    ref_eval = x + pe[:S]
    assert jnp.allclose(out_eval, ref_eval, atol=1e-6), "eval mismatch vs reference"

    # Training-mode forward (inverted dropout with in-kernel masking).
    out_train = positional_encoding_forward(x, pe, p_dropout=P_DROPOUT,
                                            training=True, rng_key=kdrop)
    out_train = jax.block_until_ready(out_train)
    u_ref = jax.random.uniform(kdrop, (S, B, D), dtype=jnp.float32)
    ref_train = jnp.where(u_ref >= P_DROPOUT, (x + pe[:S]) / (1.0 - P_DROPOUT), 0.0)
    assert jnp.allclose(out_train, ref_train, atol=1e-5, rtol=1e-5), \
        "train mismatch vs reference"

    print("KERNEL_OK")
</pallas_src>

<mosaic_0001>
module attributes {stable_mosaic.version = 11 : i64} {
  func.func @_pe_add_kernel(%arg0: i32, %arg1: memref<4x2x32xf32, #tpu.memory_space<vmem>>, %arg2: memref<4x1x32xf32, #tpu.memory_space<vmem>>, %arg3: memref<4x2x32xf32, #tpu.memory_space<vmem>>) attributes {dimension_semantics = [#tpu.dimension_semantics<parallel>], iteration_bounds = array<i64: 2>, scalar_prefetch = 0 : i64, scratch_operands = 0 : i64, tpu.core_type = #tpu.core_type<tc>, window_params = [{transform_indices = @transform_0, window_bounds = array<i64: 4, 2, 32>}, {transform_indices = @transform_1, window_bounds = array<i64: 4, 1, 32>}, {transform_indices = @transform_2, window_bounds = array<i64: 4, 2, 32>}]} {
    %c0 = arith.constant 0 : index
    %c0_0 = arith.constant 0 : index
    %c0_1 = arith.constant 0 : index
    %0 = vector.load %arg1[%c0, %c0_0, %c0_1] : memref<4x2x32xf32, #tpu.memory_space<vmem>>, vector<4x2x32xf32>
    %c0_2 = arith.constant 0 : index
    %c0_3 = arith.constant 0 : index
    %c0_4 = arith.constant 0 : index
    %1 = vector.load %arg2[%c0_2, %c0_3, %c0_4] : memref<4x1x32xf32, #tpu.memory_space<vmem>>, vector<4x1x32xf32>
    %2 = vector.broadcast %1 : vector<4x1x32xf32> to vector<4x2x32xf32>
    %3 = arith.addf %0, %2 : vector<4x2x32xf32>
    %c0_5 = arith.constant 0 : index
    %c0_6 = arith.constant 0 : index
    %c0_7 = arith.constant 0 : index
    %4 = vector.load %arg3[%c0_5, %c0_6, %c0_7] : memref<4x2x32xf32, #tpu.memory_space<vmem>>, vector<4x2x32xf32>
    tpu.vector_store %arg3[%c0_5, %c0_6, %c0_7], %3 {strides = array<i32>} : memref<4x2x32xf32, #tpu.memory_space<vmem>>, vector<4x2x32xf32>,
    return
  }
  func.func @transform_0(%arg0: i32) -> (i32, i32, i32) {
    %c0_i32 = arith.constant 0 : i32
    %c0_i32_0 = arith.constant 0 : i32
    %c0_i32_1 = arith.constant 0 : i32
    return %arg0, %c0_i32, %c0_i32_0 : i32, i32, i32
  }
  func.func @transform_1(%arg0: i32) -> (i32, i32, i32) {
    %c0_i32 = arith.constant 0 : i32
    %c0_i32_0 = arith.constant 0 : i32
    %c0_i32_1 = arith.constant 0 : i32
    return %arg0, %c0_i32, %c0_i32_0 : i32, i32, i32
  }
  func.func @transform_2(%arg0: i32) -> (i32, i32, i32) {
    %c0_i32 = arith.constant 0 : i32
    %c0_i32_0 = arith.constant 0 : i32
    %c0_i32_1 = arith.constant 0 : i32
    return %arg0, %c0_i32, %c0_i32_0 : i32, i32, i32
  }
}

</mosaic_0001>

<llo_original>
// kernel: tpu_custom_call.1
$region0: #{tpu_custom_call.1}
  #allocation0 [shape = 'u32[]', space=smem, size = 0x4, offset = 0x4, fixed_abs, tag = 'smem constant byte address 0x4 - core index']
  #allocation1 [shape = 'u32[144,128]{1,0:T(1,128)}', space=vmem, size = 0x12000, scoped, tag = 'internal scratch']
  %s0 = inlined_call_operand.hbm [shape: f32[8,2,32], index: 0, kind: input, shape index: {}]
  %s1 = inlined_call_operand.hbm [shape: f32[8,1,32], index: 1, kind: input, shape index: {}]
  %s2 = inlined_call_operand.hbm [shape: f32[8,2,32], index: 2, kind: output, shape index: {}]
  %s3 = sld [smem:[#allocation0]]
  $region49: #{tpu_custom_call.1} parent=0
    _
  %s5 = ssub.s32 1, %s3
  %s6 = scalar_select 0, %s5, %s3
  $region1: #{tpu_custom_call.1} parent=0
    #allocation2 [shape = 'u8[8192]{0}', space=vmem, size = 0x2000, scoped, tag = 'input window, operand 0']
    #allocation3 [shape = 's32[2]{0}', space=sflag, size = 0x8, scoped, tag = 'scoped memory for tpu_custom_call.1']
    #allocation4 [shape = 's32[2]{0}', space=sflag, size = 0x8, scoped, tag = 'scoped memory for tpu_custom_call.1']
    #allocation5 [shape = 'u8[4096]{0}', space=vmem, size = 0x1000, scoped, tag = 'input window, operand 1']
    #allocation6 [shape = 's32[2]{0}', space=sflag, size = 0x8, scoped, tag = 'scoped memory for tpu_custom_call.1']
    #allocation7 [shape = 'u8[8192]{0}', space=vmem, size = 0x2000, scoped, tag = 'output window, operand 0']
    %7 = vsyncpa [#allocation3], 0
    %s8 = scalar_lea.sflag [#allocation3], 1
    %9 = vsyncpa %s8, 0
    %10 = vsyncpa [#allocation6], 0
    %s11 = scalar_lea.sflag [#allocation6], 1
    %12 = vsyncpa %s11, 0
    %13 = vsyncpa [#allocation4], 0
    %s14 = scalar_lea.sflag [#allocation4], 1
    %15 = vsyncpa %s14, 0
    loop: start=0, step=1, limit=4
    $region2: #{tpu_custom_call.1} parent=1 // loop_pre_header
      _
    $region3: #{tpu_custom_call.1} parent=1 // loop_header
      %s17 = sphi 0, %s21
      %p18 = scmp.ge.s32.totalorder %s17, 4
      %s27 = sphi 0, %s29
      %s30 = sphi 0, %s27
      %s31 = sphi 0, %s30
      %s47 = sphi 0, %s31
      %s53 = sphi 0, %s55
      %s56 = sphi 0, %s53
      %s57 = sphi 0, %s56
      %s73 = sphi 0, %s57
      %s79 = sphi 0, %s81
      %s82 = sphi 0, %s79
      %s83 = sphi 0, %s82
      %s99 = sphi 0, %s83
    $region4: #{tpu_custom_call.1} parent=1 // loop_header_branch
      %20 = sbr.rel (%p18) target = $region8
    $region5: #{tpu_custom_call.1} parent=1 // loop_body
      %s22 = ssub.s32 %s17, 1
      %s23 = ssub.s32 %s17, 2
      %s24 = sadd.s32 %s17, 1
      %s25 = ssub.s32 %s17, %s24
      %p26 = scmp.eq.s32.totalorder %s25, 0
      %s28 = sadd.s32 %s27, 1
      %s29 = scalar_select %p26, %s27, %s28
      %p32 = pneg %p26
      %p33 = scmp.eq.s32.totalorder %s17, 1
      %p34 = por %p32, %p33
      %p35 = scmp.ne.s32.totalorder %s27, %s30
      %p36 = scmp.eq.s32.totalorder %s17, 0
      %p37 = por %p35, %p36
      %p38 = scmp.ne.s32.totalorder %s27, %s30
      %p39 = scmp.eq.s32.totalorder %s22, 1
      %p40 = por %p38, %p39
      %p41 = scmp.ne.s32.totalorder %s30, %s31
      %p42 = scmp.eq.s32.totalorder %s22, 0
      %p43 = por %p41, %p42
      %p44 = scmp.ne.s32.totalorder %s30, %s31
      %p45 = scmp.eq.s32.totalorder %s23, 1
      %p46 = por %p44, %p45
      %p48 = scmp.ne.s32.totalorder %s31, %s47
      %p49 = scmp.eq.s32.totalorder %s23, 0
      %p50 = por %p48, %p49
      %s51 = ssub.s32 %s17, %s24
      %p52 = scmp.eq.s32.totalorder %s51, 0
      %s54 = sadd.s32 %s53, 1
      %s55 = scalar_select %p52, %s53, %s54
      %p58 = pneg %p52
      %p59 = scmp.eq.s32.totalorder %s17, 1
      %p60 = por %p58, %p59
      %p61 = scmp.ne.s32.totalorder %s53, %s56
      %p62 = scmp.eq.s32.totalorder %s17, 0
      %p63 = por %p61, %p62
      %p64 = scmp.ne.s32.totalorder %s53, %s56
      %p65 = scmp.eq.s32.totalorder %s22, 1
      %p66 = por %p64, %p65
      %p67 = scmp.ne.s32.totalorder %s56, %s57
      %p68 = scmp.eq.s32.totalorder %s22, 0
      %p69 = por %p67, %p68
      %p70 = scmp.ne.s32.totalorder %s56, %s57
      %p71 = scmp.eq.s32.totalorder %s23, 1
      %p72 = por %p70, %p71
      %p74 = scmp.ne.s32.totalorder %s57, %s73
      %p75 = scmp.eq.s32.totalorder %s23, 0
      %p76 = por %p74, %p75
      %s77 = ssub.s32 %s17, %s24
      %p78 = scmp.eq.s32.totalorder %s77, 0
      %s80 = sadd.s32 %s79, 1
      %s81 = scalar_select %p78, %s79, %s80
      %p84 = pneg %p78
      %p85 = scmp.eq.s32.totalorder %s17, 1
      %p86 = por %p84, %p85
      %p87 = scmp.ne.s32.totalorder %s79, %s82
      %p88 = scmp.eq.s32.totalorder %s17, 0
      %p89 = por %p87, %p88
      %p90 = scmp.ne.s32.totalorder %s79, %s82
      %p91 = scmp.eq.s32.totalorder %s22, 1
      %p92 = por %p90, %p91
      %p93 = scmp.ne.s32.totalorder %s82, %s83
      %p94 = scmp.eq.s32.totalorder %s22, 0
      %p95 = por %p93, %p94
      %p96 = scmp.ne.s32.totalorder %s82, %s83
      %p97 = scmp.eq.s32.totalorder %s23, 1
      %p98 = por %p96, %p97
      %p100 = scmp.ne.s32.totalorder %s83, %s99
      %p101 = scmp.eq.s32.totalorder %s23, 0
      %p102 = por %p100, %p101
      %p103 = scmp.le.s32.totalorder 1, %s17
      %p104 = scmp.lt.s32.totalorder %s17, 3
      %p105 = pnand %p103, %p104
      %p106 = pneg %p105
      // Predicated region
      $region9: #{tpu_custom_call.1} parent=5 // pred_check
        _
      $region10: #{tpu_custom_call.1} parent=5 // pred_check_branch
        %108 = sbr.rel (%p105) target = $region12
      $region11: #{tpu_custom_call.1} parent=5 // pred_region
        %s109 = ssub.s32 %s17, 1
      $region12: #{tpu_custom_call.1} parent=5 // pred_fallthru
        _
      %p110 = scmp.lt.s32.totalorder %s17, 2
      // Predicated region
      $region13: #{tpu_custom_call.1} parent=5 // pred_check
        %p111 = pneg %p110
      $region14: #{tpu_custom_call.1} parent=5 // pred_check_branch
        %113 = sbr.rel (%p111) target = $region16
      $region15: #{tpu_custom_call.1} parent=5 // pred_region
        // Predicated region
        $region17: #{tpu_custom_call.1} parent=15 // pred_check
          %p114 = pneg %p37
        $region18: #{tpu_custom_call.1} parent=15 // pred_check_branch
          %116 = sbr.rel (%p114) target = $region20
        $region19: #{tpu_custom_call.1} parent=15 // pred_region
          %s117 = sand.u32 %s27, 1
          %s118 = scalar_lea.sflag [#allocation3], %s117
          %s119 = sand.u32 %s27, 1
          %s120 = smul.addr %s119, 8
          %s121 = scalar_lea.vmem [#allocation2], %s120
          %s122 = smul.u32 4, %s17
          %s124 = ssub.s32 128, 128
          %125 = vsyncadd %s118, %s124
          %s126 = smul.addr %s122, 32
          %s127 = scalar_lea.hbm %s0, %s126
          %s128 = sshll.u32 %s121, 4
          %s129 = int_to_ptr.vmem [resolvable:$true] %s128
          %134 = dma.hbm_to_vmem [thread:$0]  %s127, 128, %s129, %s118, 32, 32, 2
        $region20: #{tpu_custom_call.1} parent=15 // pred_fallthru
          _
        // Predicated region
        $region21: #{tpu_custom_call.1} parent=15 // pred_check
          %p135 = pneg %p63
        $region22: #{tpu_custom_call.1} parent=15 // pred_check_branch
          %137 = sbr.rel (%p135) target = $region24
        $region23: #{tpu_custom_call.1} parent=15 // pred_region
          %s138 = sand.u32 %s53, 1
          %s139 = scalar_lea.sflag [#allocation6], %s138
          %s140 = sand.u32 %s53, 1
          %s141 = smul.addr %s140, 4
          %s142 = scalar_lea.vmem [#allocation5], %s141
          %s143 = smul.u32 4, %s17
          %s145 = ssub.s32 64, 64
          %146 = vsyncadd %s139, %s145
          %s147 = smul.addr %s143, 16
          %s148 = scalar_lea.hbm %s1, %s147
          %s149 = sshll.u32 %s142, 4
          %s150 = int_to_ptr.vmem [resolvable:$true] %s149
          %155 = dma.hbm_to_vmem [thread:$0]  %s148, 64, %s150, %s139, 16, 16, 1
        $region24: #{tpu_custom_call.1} parent=15 // pred_fallthru
          _
      $region16: #{tpu_custom_call.1} parent=5 // pred_fallthru
        _
      %p156 = scmp.le.s32.totalorder 1, %s17
      %p157 = scmp.lt.s32.totalorder %s17, 3
      %p158 = pnand %p156, %p157
      %p159 = pneg %p158
      // Predicated region
      $region25: #{tpu_custom_call.1} parent=5 // pred_check
        _
      $region26: #{tpu_custom_call.1} parent=5 // pred_check_branch
        %161 = sbr.rel (%p158) target = $region28
      $region27: #{tpu_custom_call.1} parent=5 // pred_region
        %s162 = ssub.s32 %s17, 1
        %s163 = sand.u32 %s30, 1
        %s164 = scalar_lea.sflag [#allocation3], %s163
        %s165 = sand.u32 %s30, 1
        %s166 = smul.addr %s165, 8
        %s167 = scalar_lea.vmem [#allocation2], %s166
        // Predicated region
        $region29: #{tpu_custom_call.1} parent=27 // pred_check
          %p168 = pneg %p43
        $region30: #{tpu_custom_call.1} parent=27 // pred_check_branch
          %170 = sbr.rel (%p168) target = $region32
        $region31: #{tpu_custom_call.1} parent=27 // pred_region
          %171 = dma.done %s164, 128
        $region32: #{tpu_custom_call.1} parent=27 // pred_fallthru
          _
        %s172 = sand.u32 %s56, 1
        %s173 = scalar_lea.sflag [#allocation6], %s172
        %s174 = sand.u32 %s56, 1
        %s175 = smul.addr %s174, 4
        %s176 = scalar_lea.vmem [#allocation5], %s175
        // Predicated region
        $region33: #{tpu_custom_call.1} parent=27 // pred_check
          %p177 = pneg %p69
        $region34: #{tpu_custom_call.1} parent=27 // pred_check_branch
          %179 = sbr.rel (%p177) target = $region36
        $region35: #{tpu_custom_call.1} parent=27 // pred_region
          %180 = dma.done %s173, 64
        $region36: #{tpu_custom_call.1} parent=27 // pred_fallthru
          _
        %s181 = sand.u32 %s30, 1
        %s182 = scalar_lea.sflag [#allocation3], %s181
        %s183 = sand.u32 %s30, 1
        %s184 = smul.addr %s183, 8
        %s185 = scalar_lea.vmem [#allocation2], %s184
        %p186 = pneg %p43
        %p187 = pneg %p40
        %s188 = sand.u32 %s56, 1
        %s189 = scalar_lea.sflag [#allocation6], %s188
        %s190 = sand.u32 %s56, 1
        %s191 = smul.addr %s190, 4
        %s192 = scalar_lea.vmem [#allocation5], %s191
        %p193 = pneg %p69
        %p194 = pneg %p66
        %p195 = pneg %p95
        %p196 = pneg %p92
        %s197 = sand.u32 %s82, 1
        %s198 = scalar_lea.sflag [#allocation4], %s197
        %s199 = sand.u32 %s82, 1
        %s200 = smul.addr %s199, 8
        %s201 = scalar_lea.vmem [#allocation7], %s200
        %s202 = smul.u32 4, %s22
        %s203 = smul.u32 4, %s22
        %s204 = smul.u32 4, %s22
        %v205 = vld [vmem:[%s167] sm:$0x3]
        %v206 = vld [vmem:[%s167 + $0x2] sm:$0x3]
        %v207 = vld [vmem:[%s167 + $0x4] sm:$0x3]
        %v208 = vld [vmem:[%s167 + $0x6] sm:$0x3]
        %v209 = vld [vmem:[%s176] sm:$0x1]
        %v210 = vld [vmem:[%s176 + $0x1] sm:$0x1]
        %v211 = vld [vmem:[%s176 + $0x2] sm:$0x1]
        %v212 = vld [vmem:[%s176 + $0x3] sm:$0x1]
        %v217 = vlaneseq
        %v218 = vshrl.u32 %v217, 7
        %v219 = vsub.s32 0, %v218
        %v220 = vrot.slane %v209, %v219
        %v221 = vlaneseq
        %v222 = vshrl.u32 %v221, 7
        %v223 = vsub.s32 0, %v222
        %v224 = vrot.slane %v210, %v223
        %v225 = vlaneseq
        %v226 = vshrl.u32 %v225, 7
        %v227 = vsub.s32 0, %v226
        %v228 = vrot.slane %v211, %v227
        %v229 = vlaneseq
        %v230 = vshrl.u32 %v229, 7
        %v231 = vsub.s32 0, %v230
        %v232 = vrot.slane %v212, %v231
        %v237 = vadd.f32 %v205, %v220
        %v238 = vadd.f32 %v206, %v224
        %v239 = vadd.f32 %v207, %v228
        %v240 = vadd.f32 %v208, %v232
        %vm241 = vcmask 254976
        %242 = vst.msk [vmem:[%s201] sm:$0x3] %vm241, %v237
        %243 = vst.msk [vmem:[%s201 + $0x2] sm:$0x3] %vm241, %v238
        %244 = vst.msk [vmem:[%s201 + $0x4] sm:$0x3] %vm241, %v239
        %245 = vst.msk [vmem:[%s201 + $0x6] sm:$0x3] %vm241, %v240
        %s246 = sand.u32 %s82, 1
        %s247 = scalar_lea.sflag [#allocation4], %s246
        %s248 = sand.u32 %s82, 1
        %s249 = smul.addr %s248, 8
        %s250 = scalar_lea.vmem [#allocation7], %s249
        // Predicated region
        $region37: #{tpu_custom_call.1} parent=27 // pred_check
          %p251 = pneg %p92
        $region38: #{tpu_custom_call.1} parent=27 // pred_check_branch
          %253 = sbr.rel (%p251) target = $region40
        $region39: #{tpu_custom_call.1} parent=27 // pred_region
          %s254 = smul.u32 4, %s22
          %s256 = ssub.s32 128, 128
          %257 = vsyncadd %s247, %s256
          %s258 = smul.addr %s254, 32
          %s259 = scalar_lea.hbm %s2, %s258
          %s260 = sshll.u32 %s250, 4
          %s261 = int_to_ptr.vmem [resolvable:$true] %s260
          %266 = dma.vmem_to_hbm [thread:$0]  %s261, 128, %s259, %s247, 32, 32, 2
        $region40: #{tpu_custom_call.1} parent=27 // pred_fallthru
          _
      $region28: #{tpu_custom_call.1} parent=5 // pred_fallthru
        _
      %p267 = scmp.le.s32.totalorder 2, %s17
      // Predicated region
      $region41: #{tpu_custom_call.1} parent=5 // pred_check
        %p268 = pneg %p267
      $region42: #{tpu_custom_call.1} parent=5 // pred_check_branch
        %270 = sbr.rel (%p268) target = $region44
      $region43: #{tpu_custom_call.1} parent=5 // pred_region
        %s271 = ssub.s32 %s17, 2
        // Predicated region
        $region45: #{tpu_custom_call.1} parent=43 // pred_check
          %p272 = pneg %p98
        $region46: #{tpu_custom_call.1} parent=43 // pred_check_branch
          %274 = sbr.rel (%p272) target = $region48
        $region47: #{tpu_custom_call.1} parent=43 // pred_region
          %s275 = sand.u32 %s83, 1
          %s276 = scalar_lea.sflag [#allocation4], %s275
          %s277 = sand.u32 %s83, 1
          %s278 = smul.addr %s277, 8
          %s279 = scalar_lea.vmem [#allocation7], %s278
          %280 = dma.done %s276, 128
        $region48: #{tpu_custom_call.1} parent=43 // pred_fallthru
          _
      $region44: #{tpu_custom_call.1} parent=5 // pred_fallthru
        _
    $region6: #{tpu_custom_call.1} parent=1 // loop_footer
      %s21 = sadd.s32 1, %s17
    $region7: #{tpu_custom_call.1} parent=1 // loop_footer_branch
      %16 = sbr.rel target = $region3
    $region8: #{tpu_custom_call.1} parent=1 // loop_exit
      _
    %281 = vsyncpa [#allocation3], 1
    %s282 = scalar_lea.sflag [#allocation3], 1
    %283 = vsyncpa %s282, 1
    %284 = vsyncpa [#allocation6], 1
    %s285 = scalar_lea.sflag [#allocation6], 1
    %286 = vsyncpa %s285, 1
    %287 = vsyncpa [#allocation4], 1
    %s288 = scalar_lea.sflag [#allocation4], 1
    %289 = vsyncpa %s288, 1

</llo_original>
